<compile_context>
chip_gen: v6e
topology: v6e:2x2x1
jax: 0.10.0
libtpu: 0.0.40
codegen_flags: <defaults>
</compile_context>

<pallas_src>
import numpy as np

import jax
import jax.numpy as jnp
from jax.experimental import pallas as pl
from jax.experimental.pallas import tpu as pltpu

# ---- hyperparameters (small, consistent with the module) -------------------
WINDOW = 16          # window_size
HIDDEN = 32          # lstm_hidden_size
LSTM_LAYERS = 2      # lstm_layer_count
K = 3                # cnn_kernel_size
PROJ_LSTM = 4        # hybrid_projection_lstm
PROJ_CNN = 8         # hybrid_projection_cnn
MLP_DEPTH = 3        # mlp_depth (>1)
MLP_MID = 10
MLP_IN = 3           # 3 + len(techData), techData = []


# ---- parameter construction (torch layouts) ---------------------------------
def build_torch_params(key):
    ks = iter(jax.random.split(key, 64))

    def u(*shape):
        return jax.random.uniform(next(ks), shape, jnp.float32,
                                  minval=-0.2, maxval=0.2)

    p = {}

    def lstm(prefix, in_size, proj):
        layers = []
        for l in range(LSTM_LAYERS):
            isz = in_size if l == 0 else proj
            layers.append(dict(
                w_ih=u(4 * HIDDEN, isz),       # torch weight_ih_l{k}
                b_ih=u(4 * HIDDEN),            # torch bias_ih_l{k}
                b_hh=u(4 * HIDDEN),            # torch bias_hh_l{k}
                w_hr=u(proj, HIDDEN),          # torch weight_hr_l{k}
                # weight_hh_l{k} omitted: h0 == 0 and seq_len == 1 => unused (exact).
            ))
        p[prefix] = layers

    lstm("la", WINDOW, 1)                      # net[0]  LSTM(proj=1)
    lstm("lb", WINDOW, PROJ_LSTM)              # net[4]  LSTM(proj=PROJ_LSTM)
    p["conv1_w"] = u(16, 1, K);        p["conv1_b"] = u(16)         # net[2]
    p["conv2_w"] = u(1, 16, K);        p["conv2_b"] = u(1)          # net[3]
    p["conv3_w"] = u(PROJ_CNN, 1, K);  p["conv3_b"] = u(PROJ_CNN)   # net[6]
    dims = [MLP_IN] + [MLP_MID] * (MLP_DEPTH - 1) + [1]
    p["mlp"] = [dict(w=u(dout, din), b=u(dout))
                for din, dout in zip(dims[:-1], dims[1:])]
    return p


# ---- compact shelf-packing of all parameters into one (R, 128) slab ---------
def pack_params(p):
    entries = []

    def add(name, arr):
        a = np.asarray(arr, np.float32)
        assert a.ndim == 2 and a.shape[1] <= 128
        entries.append((name, a))

    for prefix in ("la", "lb"):
        for l, layer in enumerate(p[prefix]):
            add(f"{prefix}_wih{l}", np.asarray(layer["w_ih"]).T)                 # (in, 4H)
            add(f"{prefix}_b{l}",
                (np.asarray(layer["b_ih"]) + np.asarray(layer["b_hh"])).reshape(1, -1))
            add(f"{prefix}_whr{l}", np.asarray(layer["w_hr"]))                   # (proj, H)

    # conv weights stored as (rows, K[+1]) blocks so each tap is a static
    # column slice; bias appended as an extra column where natural.
    add("conv1_blk", np.concatenate([np.asarray(p["conv1_w"])[:, 0, :],
                                     np.asarray(p["conv1_b"]).reshape(-1, 1)], axis=1))
    add("conv2_w", np.asarray(p["conv2_w"])[0])                                  # (16, K)
    add("conv2_b", np.asarray(p["conv2_b"]).reshape(1, 1))                       # (1, 1)
    add("conv3_blk", np.concatenate([np.asarray(p["conv3_w"])[:, 0, :],
                                     np.asarray(p["conv3_b"]).reshape(-1, 1)], axis=1))

    # MLP layer 0 consumed as three scalar FMAs: torch (out,in) + bias column.
    m0 = p["mlp"][0]
    add("mlp0_blk", np.concatenate([np.asarray(m0["w"]),
                                    np.asarray(m0["b"]).reshape(-1, 1)], axis=1))
    # Remaining layers alternate column->row->column orientation in the kernel.
    for li in range(1, MLP_DEPTH):
        w = np.asarray(p["mlp"][li]["w"])
        b = np.asarray(p["mlp"][li]["b"])
        if li % 2 == 1:                         # consumes a column -> sublane reduce
            add(f"mlp{li}_w", w.T)              # (din, dout)
            add(f"mlp{li}_b", b.reshape(1, -1))
        else:                                   # consumes a row -> lane reduce
            add(f"mlp{li}_w", w)                # (dout, din)
            add(f"mlp{li}_b", b.reshape(-1, 1))

    # --- 2-tier compact layout -------------------------------------------
    # Tier 1: wide (>96 lane) blocks stacked vertically with NO row padding,
    #         tallest first so the two 16x128 LSTM input matrices stay
    #         tile-aligned.
    # Tier 2: narrow blocks shelf-packed side by side inside shared row
    #         groups (distinct sublane + lane offsets).
    wide = [(n, a) for n, a in entries if a.shape[1] > 96]
    narrow = [(n, a) for n, a in entries if a.shape[1] <= 96]
    wide.sort(key=lambda na: -na[1].shape[0])
    narrow.sort(key=lambda na: (-na[1].shape[0], -na[1].shape[1]))

    offs = {}
    row = 0
    for n, a in wide:
        offs[n] = (row, 0, a.shape[0], a.shape[1])
        row += a.shape[0]
    row = (row + 7) & ~7                         # start shelves on a tile row
    shelves = []                                 # (row_start, height, lane_cursor)
    for n, a in narrow:
        nr, nc = a.shape
        placed = False
        for si, (r0, h, lc) in enumerate(shelves):
            if h >= nr and lc + nc <= 128:
                offs[n] = (r0, lc, nr, nc)
                shelves[si] = (r0, h, lc + ((nc + 7) & ~7))
                placed = True
                break
        if not placed:
            offs[n] = (row, 0, nr, nc)
            shelves.append((row, nr, (nc + 7) & ~7))
            row += nr
    R = (row + 7) & ~7

    slab = np.zeros((R, 128), np.float32)
    for n, a in entries:
        r, c, nr, nc = offs[n]
        slab[r:r + nr, c:c + nc] = a
    return jnp.asarray(slab), offs


# ---- Pallas kernel (offsets are closed over as static Python ints) ----------
def make_kernel(offs):
    H = HIDDEN

    def g(ref, name):
        r, c, nr, nc = offs[name]
        return ref[r:r + nr, c:c + nc]           # static slice of the VMEM ref

    def lstm_branch(p_ref, x_col, prefix):
        # Single-timestep multilayer LSTM with proj_size; zero initial state
        # => weight_hh and the forget gate drop out exactly.
        h_col = x_col                                                     # (in, 1)
        for l in range(LSTM_LAYERS):
            w_ih_t = g(p_ref, f"{prefix}_wih{l}")                         # (in, 4H)
            b_row = g(p_ref, f"{prefix}_b{l}")                            # (1, 4H)
            w_hr = g(p_ref, f"{prefix}_whr{l}")                           # (proj, H)
            gates = jnp.sum(w_ih_t * h_col, axis=0, keepdims=True) + b_row  # (1, 4H)
            # One full-vreg tanh covers both sigmoid gates (tanh-form sigmoid):
            #   sigmoid(v) = 0.5 * (tanh(0.5 * v) + 1)
            t = jnp.tanh(0.5 * gates)                                     # (1, 4H)
            i = 0.5 * (t[:, 0:H] + 1.0)                                   # input gate
            o = 0.5 * (t[:, 3 * H:4 * H] + 1.0)                           # output gate
            c = i * jnp.tanh(gates[:, 2 * H:3 * H])                       # f * c0 == 0
            hpre = o * jnp.tanh(c)                                        # (1, H)
            h_col = jnp.sum(w_hr * hpre, axis=1, keepdims=True)           # (proj, 1)
        return h_col

    def cnn_branch(p_ref, x_row):
        # Conv1d(1->16,K) -> ReLU -> MaxPool(2) -> Conv1d(16->1,K) -> ReLU
        # -> MaxPool(2) -> mean, all on VPU/XLU.
        L1 = WINDOW - K + 1                 # conv1 output length (14)
        P1 = L1 // 2                        # after first pool          (7)
        L2 = P1 - K + 1                     # conv2 output length       (5)
        P2 = L2 // 2                        # after second pool         (2)
        ZW = 2 * (2 * P2 - 1) + 1           # stride-2 evaluation width (7)

        c1 = g(p_ref, "conv1_blk")          # (16, K+1)
        r1 = c1[:, K:K + 1]                 # bias column (16, 1)
        for k in range(K):
            r1 = r1 + c1[:, k:k + 1] * x_row[:, k:k + L1]       # (16,1)*(1,L1)
        r1 = jnp.maximum(r1, 0.0)                               # (16, L1)

        # rolling max: m[c, q] = max(r1[c, q], r1[c, q+1]); pool1[c, j] = m[c, 2j]
        m = jnp.maximum(r1[:, 0:L1 - 1], r1[:, 1:L1])           # (16, L1-1)

        # conv2 (16->1) evaluated on the stride-2 grid of m: z[0, 2l] == conv2[l]
        w2 = g(p_ref, "conv2_w")                                # (16, K)
        z = g(p_ref, "conv2_b")                                 # (1, 1)
        for k in range(K):
            z = z + jnp.sum(w2[:, k:k + 1] * m[:, 2 * k:2 * k + ZW],
                            axis=0, keepdims=True)              # (1, ZW)
        zr = jnp.maximum(z, 0.0)

        # second pool + mean: pairs (y[2j], y[2j+1]) live at lanes (4j, 4j+2)
        acc = None
        for j in range(P2):
            pj = jnp.maximum(zr[:, 4 * j:4 * j + 1], zr[:, 4 * j + 2:4 * j + 3])
            acc = pj if acc is None else acc + pj
        return acc * (1.0 / P2)                                 # (1, 1)

    def hybrid_branch(p_ref, h_col):
        # ReLU'd LSTM-B output (PROJ_LSTM, 1) -> Conv1d(1->PROJ_CNN,K) -> ReLU -> mean
        c3 = g(p_ref, "conv3_blk")                              # (PROJ_CNN, K+1)
        Lh = PROJ_LSTM - K + 1                                  # (2)
        total = None
        for l in range(Lh):
            col = c3[:, K:K + 1]                                # bias (PROJ_CNN, 1)
            for k in range(K):
                col = col + c3[:, k:k + 1] * h_col[l + k:l + k + 1, :]   # (Pc,1)*(1,1)
            col = jnp.maximum(col, 0.0)
            s = jnp.sum(col, axis=0, keepdims=True)             # (1, 1)
            total = s if total is None else total + s
        return total * (1.0 / (PROJ_CNN * Lh))                  # (1, 1)

    def mlp(p_ref, hyb_s, cnn_s, lstm_s):
        blk = g(p_ref, "mlp0_blk")                              # (MLP_MID, MLP_IN+1)
        h = blk[:, MLP_IN:MLP_IN + 1]                           # bias column
        for i, feat in enumerate((hyb_s, cnn_s, lstm_s)):       # MLPIn ordering
            h = h + blk[:, i:i + 1] * feat                      # scalar FMAs, (MLP_MID,1)
        h_is_col = True
        for li in range(1, MLP_DEPTH):                          # plain Linear chain,
            w = g(p_ref, f"mlp{li}_w")                          # no activations; the
            b = g(p_ref, f"mlp{li}_b")                          # trailing ReLU is never
            if h_is_col:                                        # applied by forward().
                h = jnp.sum(w * h, axis=0, keepdims=True) + b   # (1, dout)
            else:
                h = jnp.sum(w * h, axis=1, keepdims=True) + b   # (dout, 1)
            h_is_col = not h_is_col
        return h                                                # (1, 1) (final dout == 1)

    def kernel(xr_ref, xc_ref, p_ref, o_ref):
        x_row = xr_ref[...]                                     # (1, WINDOW)
        x_col = xc_ref[...]                                     # (WINDOW, 1)

        lstm_s = jnp.maximum(lstm_branch(p_ref, x_col, "la"), 0.0)     # (1, 1)
        hyb_col = jnp.maximum(lstm_branch(p_ref, x_col, "lb"), 0.0)    # (PROJ_LSTM, 1)
        cnn_s = cnn_branch(p_ref, x_row)                               # (1, 1)
        hyb_s = hybrid_branch(p_ref, hyb_col)                          # (1, 1)

        o_ref[...] = mlp(p_ref, hyb_s, cnn_s, lstm_s)

    return kernel


# ---- wrapper -----------------------------------------------------------------
def make_ensemble_forward(offs):
    kernel = make_kernel(offs)

    @jax.jit
    def forward_batched(xb, param_slab):
        # xb: (B, WINDOW) -- one independent window per row.  Per-sample
        # semantics are identical to the torch module's forward on an input
        # of shape (seq_len=1, window_size).
        B = xb.shape[0]
        R = param_slab.shape[0]
        x_row = xb.reshape(B, 1, WINDOW)       # free reshape (no HBM round trip)
        x_col = xb.reshape(B, WINDOW, 1)       # free reshape (no HBM round trip)
        out = pl.pallas_call(
            kernel,
            out_shape=jax.ShapeDtypeStruct((B, 1, 1), jnp.float32),
            grid=(B,),
            in_specs=[
                pl.BlockSpec((None, 1, WINDOW), lambda b: (b, 0, 0)),
                pl.BlockSpec((None, WINDOW, 1), lambda b: (b, 0, 0)),
                # constant block index => slab stays VMEM-resident across the grid
                pl.BlockSpec((R, 128), lambda b: (0, 0)),
            ],
            out_specs=pl.BlockSpec((None, 1, 1), lambda b: (b, 0, 0)),
            compiler_params=pltpu.CompilerParams(
                dimension_semantics=("parallel",)),   # lets v7x split the batch
        )(x_row, x_col, param_slab)
        return out.reshape(B, 1)

    return forward_batched


# ---- independent pure-JAX reference (straightforward torch-layout math) ------
def reference_forward(x, p):
    def sigmoid(v):
        return 1.0 / (1.0 + jnp.exp(-v))

    def lstm(prefix):
        h = x[0]                                                 # (in,)
        for layer in p[prefix]:
            gates = layer["w_ih"] @ h + layer["b_ih"] + layer["b_hh"]  # W_hh @ h0 == 0
            i = sigmoid(gates[0:HIDDEN])
            c = i * jnp.tanh(gates[2 * HIDDEN:3 * HIDDEN])             # f * c0 == 0
            o = sigmoid(gates[3 * HIDDEN:4 * HIDDEN])
            h = layer["w_hr"] @ (o * jnp.tanh(c))                # (proj,)
        return h

    def conv1d(xc, w, b):                                        # xc:(Cin,L) w:(Cout,Cin,K)
        l_out = xc.shape[1] - K + 1
        out = jnp.broadcast_to(b[:, None], (w.shape[0], l_out))
        for k in range(K):
            out = out + w[:, :, k] @ xc[:, k:k + l_out]
        return out

    def maxpool2(v):
        l_out = v.shape[1] // 2
        return jnp.maximum(v[:, 0:2 * l_out:2], v[:, 1:2 * l_out:2])

    relu = jax.nn.relu
    lstm_s = relu(lstm("la"))[0]
    c = maxpool2(relu(conv1d(x, p["conv1_w"], p["conv1_b"])))
    c = maxpool2(relu(conv1d(c, p["conv2_w"], p["conv2_b"])))
    cnn_s = jnp.mean(c)
    hb = relu(lstm("lb"))                                        # (PROJ_LSTM,)
    hyb_s = jnp.mean(relu(conv1d(hb[None, :], p["conv3_w"], p["conv3_b"])))
    h = jnp.stack([hyb_s, cnn_s, lstm_s])                        # MLPIn
    for layer in p["mlp"]:
        h = layer["w"] @ h + layer["b"]
    return h                                                     # (1,)


if __name__ == "__main__":
    key = jax.random.PRNGKey(0)
    pkey, xkey = jax.random.split(key)

    tparams = build_torch_params(pkey)
    slab, offs = pack_params(tparams)
    forward_batched = make_ensemble_forward(offs)

    # Batch of independent windows; each row is one (seq_len=1, window_size) input.
    B = 8
    xb = jax.random.uniform(xkey, (B, WINDOW), jnp.float32, minval=-1.0, maxval=1.0)

    out = jax.block_until_ready(forward_batched(xb, slab))          # (B, 1)
    ref = jnp.stack([reference_forward(xb[i:i + 1], tparams) for i in range(B)])
    assert out.shape == (B, 1)
    assert jnp.allclose(out, ref, atol=1e-4, rtol=1e-4), (out, ref)

    # Single-sample path (exactly the torch module's forward signature/output).
    x1 = xb[0:1]                                                    # (1, WINDOW)
    out1 = jax.block_until_ready(forward_batched(x1, slab)).reshape(1)
    ref1 = reference_forward(x1, tparams)
    assert out1.shape == (1,)
    assert jnp.allclose(out1, ref1, atol=1e-4, rtol=1e-4), (out1, ref1)

    print("KERNEL_OK")
</pallas_src>

<mosaic_0001>
module attributes {stable_mosaic.version = 11 : i64} {
  func.func @kernel(%arg0: i32, %arg1: memref<1x1x16xf32, #tpu.memory_space<vmem>>, %arg2: memref<1x16x1xf32, #tpu.memory_space<vmem>>, %arg3: memref<72x128xf32, #tpu.memory_space<vmem>>, %arg4: memref<1x1x1xf32, #tpu.memory_space<vmem>>) attributes {dimension_semantics = [#tpu.dimension_semantics<parallel>], iteration_bounds = array<i64: 8>, scalar_prefetch = 0 : i64, scratch_operands = 0 : i64, tpu.core_type = #tpu.core_type<tc>, window_params = [{transform_indices = @transform_0, window_bounds = array<i64: 1, 1, 16>}, {transform_indices = @transform_1, window_bounds = array<i64: 1, 16, 1>}, {pipeline_mode = #tpu.pipeline_mode<synchronous>, transform_indices = @transform_2, window_bounds = array<i64: 72, 128>}, {transform_indices = @transform_3, window_bounds = array<i64: 1, 1, 1>}]} {
    %c0 = arith.constant 0 : index
    %c0_0 = arith.constant 0 : index
    %c0_1 = arith.constant 0 : index
    %0 = vector.load %arg1[%c0, %c0_0, %c0_1] : memref<1x1x16xf32, #tpu.memory_space<vmem>>, vector<1x1x16xf32>
    %1 = vector.shape_cast %0 : vector<1x1x16xf32> to vector<1x16xf32>
    %c0_2 = arith.constant 0 : index
    %c0_3 = arith.constant 0 : index
    %c0_4 = arith.constant 0 : index
    %2 = vector.load %arg2[%c0_2, %c0_3, %c0_4] : memref<1x16x1xf32, #tpu.memory_space<vmem>>, vector<1x16x1xf32>
    %3 = vector.shape_cast %2 : vector<1x16x1xf32> to vector<16x1xf32>
    %c0_5 = arith.constant 0 : index
    %c0_6 = arith.constant 0 : index
    %4 = vector.load %arg3[%c0_5, %c0_6] : memref<72x128xf32, #tpu.memory_space<vmem>>, vector<16x128xf32>
    %c36 = arith.constant 36 : index
    %c0_7 = arith.constant 0 : index
    %5 = vector.load %arg3[%c36, %c0_7] : memref<72x128xf32, #tpu.memory_space<vmem>>, vector<1x128xf32>
    %c64 = arith.constant 64 : index
    %c0_8 = arith.constant 0 : index
    %6 = vector.load %arg3[%c64, %c0_8] : memref<72x128xf32, #tpu.memory_space<vmem>>, vector<1x32xf32>
    %7 = vector.broadcast %3 : vector<16x1xf32> to vector<16x128xf32>
    %8 = arith.mulf %4, %7 : vector<16x128xf32>
    %cst = arith.constant dense<0.000000e+00> : vector<128xf32>
    %9 = vector.multi_reduction <add>, %8, %cst [0] : vector<16x128xf32> to vector<128xf32>
    %10 = vector.shape_cast %9 : vector<128xf32> to vector<1x128xf32>
    %11 = arith.addf %10, %5 : vector<1x128xf32>
    %cst_9 = arith.constant 5.000000e-01 : f32
    %12 = vector.broadcast %cst_9 : f32 to vector<1x128xf32>
    %13 = arith.mulf %12, %11 : vector<1x128xf32>
    %14 = math.tanh %13 : vector<1x128xf32>
    %15 = vector.extract_strided_slice %14 {offsets = [0, 0], sizes = [1, 32], strides = [1, 1]} : vector<1x128xf32> to vector<1x32xf32>
    %cst_10 = arith.constant 1.000000e+00 : f32
    %16 = vector.broadcast %cst_10 : f32 to vector<1x32xf32>
    %17 = arith.addf %15, %16 : vector<1x32xf32>
    %cst_11 = arith.constant 5.000000e-01 : f32
    %18 = vector.broadcast %cst_11 : f32 to vector<1x32xf32>
    %19 = arith.mulf %18, %17 : vector<1x32xf32>
    %20 = vector.extract_strided_slice %14 {offsets = [0, 96], sizes = [1, 32], strides = [1, 1]} : vector<1x128xf32> to vector<1x32xf32>
    %cst_12 = arith.constant 1.000000e+00 : f32
    %21 = vector.broadcast %cst_12 : f32 to vector<1x32xf32>
    %22 = arith.addf %20, %21 : vector<1x32xf32>
    %cst_13 = arith.constant 5.000000e-01 : f32
    %23 = vector.broadcast %cst_13 : f32 to vector<1x32xf32>
    %24 = arith.mulf %23, %22 : vector<1x32xf32>
    %25 = vector.extract_strided_slice %11 {offsets = [0, 64], sizes = [1, 32], strides = [1, 1]} : vector<1x128xf32> to vector<1x32xf32>
    %26 = math.tanh %25 : vector<1x32xf32>
    %27 = arith.mulf %19, %26 : vector<1x32xf32>
    %28 = math.tanh %27 : vector<1x32xf32>
    %29 = arith.mulf %24, %28 : vector<1x32xf32>
    %30 = arith.mulf %6, %29 : vector<1x32xf32>
    %cst_14 = arith.constant dense<0.000000e+00> : vector<1xf32>
    %31 = vector.multi_reduction <add>, %30, %cst_14 [1] : vector<1x32xf32> to vector<1xf32>
    %32 = vector.shape_cast %31 : vector<1xf32> to vector<1x1xf32>
    %c37 = arith.constant 37 : index
    %c0_15 = arith.constant 0 : index
    %33 = vector.load %arg3[%c37, %c0_15] : memref<72x128xf32, #tpu.memory_space<vmem>>, vector<1x128xf32>
    %c38 = arith.constant 38 : index
    %c0_16 = arith.constant 0 : index
    %34 = vector.load %arg3[%c38, %c0_16] : memref<72x128xf32, #tpu.memory_space<vmem>>, vector<1x128xf32>
    %c64_17 = arith.constant 64 : index
    %c32 = arith.constant 32 : index
    %35 = vector.load %arg3[%c64_17, %c32] : memref<72x128xf32, #tpu.memory_space<vmem>>, vector<1x32xf32>
    %36 = vector.broadcast %32 : vector<1x1xf32> to vector<1x128xf32>
    %37 = arith.mulf %33, %36 : vector<1x128xf32>
    %cst_18 = arith.constant dense<0.000000e+00> : vector<128xf32>
    %38 = vector.multi_reduction <add>, %37, %cst_18 [0] : vector<1x128xf32> to vector<128xf32>
    %39 = vector.shape_cast %38 : vector<128xf32> to vector<1x128xf32>
    %40 = arith.addf %39, %34 : vector<1x128xf32>
    %cst_19 = arith.constant 5.000000e-01 : f32
    %41 = vector.broadcast %cst_19 : f32 to vector<1x128xf32>
    %42 = arith.mulf %41, %40 : vector<1x128xf32>
    %43 = math.tanh %42 : vector<1x128xf32>
    %44 = vector.extract_strided_slice %43 {offsets = [0, 0], sizes = [1, 32], strides = [1, 1]} : vector<1x128xf32> to vector<1x32xf32>
    %cst_20 = arith.constant 1.000000e+00 : f32
    %45 = vector.broadcast %cst_20 : f32 to vector<1x32xf32>
    %46 = arith.addf %44, %45 : vector<1x32xf32>
    %cst_21 = arith.constant 5.000000e-01 : f32
    %47 = vector.broadcast %cst_21 : f32 to vector<1x32xf32>
    %48 = arith.mulf %47, %46 : vector<1x32xf32>
    %49 = vector.extract_strided_slice %43 {offsets = [0, 96], sizes = [1, 32], strides = [1, 1]} : vector<1x128xf32> to vector<1x32xf32>
    %cst_22 = arith.constant 1.000000e+00 : f32
    %50 = vector.broadcast %cst_22 : f32 to vector<1x32xf32>
    %51 = arith.addf %49, %50 : vector<1x32xf32>
    %cst_23 = arith.constant 5.000000e-01 : f32
    %52 = vector.broadcast %cst_23 : f32 to vector<1x32xf32>
    %53 = arith.mulf %52, %51 : vector<1x32xf32>
    %54 = vector.extract_strided_slice %40 {offsets = [0, 64], sizes = [1, 32], strides = [1, 1]} : vector<1x128xf32> to vector<1x32xf32>
    %55 = math.tanh %54 : vector<1x32xf32>
    %56 = arith.mulf %48, %55 : vector<1x32xf32>
    %57 = math.tanh %56 : vector<1x32xf32>
    %58 = arith.mulf %53, %57 : vector<1x32xf32>
    %59 = arith.mulf %35, %58 : vector<1x32xf32>
    %cst_24 = arith.constant dense<0.000000e+00> : vector<1xf32>
    %60 = vector.multi_reduction <add>, %59, %cst_24 [1] : vector<1x32xf32> to vector<1xf32>
    %61 = vector.shape_cast %60 : vector<1xf32> to vector<1x1xf32>
    %cst_25 = arith.constant 0.000000e+00 : f32
    %62 = vector.broadcast %cst_25 : f32 to vector<1x1xf32>
    %63 = arith.maximumf %61, %62 : vector<1x1xf32>
    %c16 = arith.constant 16 : index
    %c0_26 = arith.constant 0 : index
    %64 = vector.load %arg3[%c16, %c0_26] : memref<72x128xf32, #tpu.memory_space<vmem>>, vector<16x128xf32>
    %c39 = arith.constant 39 : index
    %c0_27 = arith.constant 0 : index
    %65 = vector.load %arg3[%c39, %c0_27] : memref<72x128xf32, #tpu.memory_space<vmem>>, vector<1x128xf32>
    %c48 = arith.constant 48 : index
    %c48_28 = arith.constant 48 : index
    %66 = vector.load %arg3[%c48, %c48_28] : memref<72x128xf32, #tpu.memory_space<vmem>>, vector<4x32xf32>
    %67 = vector.broadcast %3 : vector<16x1xf32> to vector<16x128xf32>
    %68 = arith.mulf %64, %67 : vector<16x128xf32>
    %cst_29 = arith.constant dense<0.000000e+00> : vector<128xf32>
    %69 = vector.multi_reduction <add>, %68, %cst_29 [0] : vector<16x128xf32> to vector<128xf32>
    %70 = vector.shape_cast %69 : vector<128xf32> to vector<1x128xf32>
    %71 = arith.addf %70, %65 : vector<1x128xf32>
    %cst_30 = arith.constant 5.000000e-01 : f32
    %72 = vector.broadcast %cst_30 : f32 to vector<1x128xf32>
    %73 = arith.mulf %72, %71 : vector<1x128xf32>
    %74 = math.tanh %73 : vector<1x128xf32>
    %75 = vector.extract_strided_slice %74 {offsets = [0, 0], sizes = [1, 32], strides = [1, 1]} : vector<1x128xf32> to vector<1x32xf32>
    %cst_31 = arith.constant 1.000000e+00 : f32
    %76 = vector.broadcast %cst_31 : f32 to vector<1x32xf32>
    %77 = arith.addf %75, %76 : vector<1x32xf32>
    %cst_32 = arith.constant 5.000000e-01 : f32
    %78 = vector.broadcast %cst_32 : f32 to vector<1x32xf32>
    %79 = arith.mulf %78, %77 : vector<1x32xf32>
    %80 = vector.extract_strided_slice %74 {offsets = [0, 96], sizes = [1, 32], strides = [1, 1]} : vector<1x128xf32> to vector<1x32xf32>
    %cst_33 = arith.constant 1.000000e+00 : f32
    %81 = vector.broadcast %cst_33 : f32 to vector<1x32xf32>
    %82 = arith.addf %80, %81 : vector<1x32xf32>
    %cst_34 = arith.constant 5.000000e-01 : f32
    %83 = vector.broadcast %cst_34 : f32 to vector<1x32xf32>
    %84 = arith.mulf %83, %82 : vector<1x32xf32>
    %85 = vector.extract_strided_slice %71 {offsets = [0, 64], sizes = [1, 32], strides = [1, 1]} : vector<1x128xf32> to vector<1x32xf32>
    %86 = math.tanh %85 : vector<1x32xf32>
    %87 = arith.mulf %79, %86 : vector<1x32xf32>
    %88 = math.tanh %87 : vector<1x32xf32>
    %89 = arith.mulf %84, %88 : vector<1x32xf32>
    %90 = vector.broadcast %89 : vector<1x32xf32> to vector<4x32xf32>
    %91 = arith.mulf %66, %90 : vector<4x32xf32>
    %cst_35 = arith.constant dense<0.000000e+00> : vector<4xf32>
    %92 = vector.multi_reduction <add>, %91, %cst_35 [1] : vector<4x32xf32> to vector<4xf32>
    %93 = vector.shape_cast %92 : vector<4xf32> to vector<4x1xf32>
    %c32_36 = arith.constant 32 : index
    %c0_37 = arith.constant 0 : index
    %94 = vector.load %arg3[%c32_36, %c0_37] : memref<72x128xf32, #tpu.memory_space<vmem>>, vector<4x128xf32>
    %c40 = arith.constant 40 : index
    %c0_38 = arith.constant 0 : index
    %95 = vector.load %arg3[%c40, %c0_38] : memref<72x128xf32, #tpu.memory_space<vmem>>, vector<1x128xf32>
    %c48_39 = arith.constant 48 : index
    %c80 = arith.constant 80 : index
    %96 = vector.load %arg3[%c48_39, %c80] : memref<72x128xf32, #tpu.memory_space<vmem>>, vector<4x32xf32>
    %97 = vector.broadcast %93 : vector<4x1xf32> to vector<4x128xf32>
    %98 = arith.mulf %94, %97 : vector<4x128xf32>
    %cst_40 = arith.constant dense<0.000000e+00> : vector<128xf32>
    %99 = vector.multi_reduction <add>, %98, %cst_40 [0] : vector<4x128xf32> to vector<128xf32>
    %100 = vector.shape_cast %99 : vector<128xf32> to vector<1x128xf32>
    %101 = arith.addf %100, %95 : vector<1x128xf32>
    %cst_41 = arith.constant 5.000000e-01 : f32
    %102 = vector.broadcast %cst_41 : f32 to vector<1x128xf32>
    %103 = arith.mulf %102, %101 : vector<1x128xf32>
    %104 = math.tanh %103 : vector<1x128xf32>
    %105 = vector.extract_strided_slice %104 {offsets = [0, 0], sizes = [1, 32], strides = [1, 1]} : vector<1x128xf32> to vector<1x32xf32>
    %cst_42 = arith.constant 1.000000e+00 : f32
    %106 = vector.broadcast %cst_42 : f32 to vector<1x32xf32>
    %107 = arith.addf %105, %106 : vector<1x32xf32>
    %cst_43 = arith.constant 5.000000e-01 : f32
    %108 = vector.broadcast %cst_43 : f32 to vector<1x32xf32>
    %109 = arith.mulf %108, %107 : vector<1x32xf32>
    %110 = vector.extract_strided_slice %104 {offsets = [0, 96], sizes = [1, 32], strides = [1, 1]} : vector<1x128xf32> to vector<1x32xf32>
    %cst_44 = arith.constant 1.000000e+00 : f32
    %111 = vector.broadcast %cst_44 : f32 to vector<1x32xf32>
    %112 = arith.addf %110, %111 : vector<1x32xf32>
    %cst_45 = arith.constant 5.000000e-01 : f32
    %113 = vector.broadcast %cst_45 : f32 to vector<1x32xf32>
    %114 = arith.mulf %113, %112 : vector<1x32xf32>
    %115 = vector.extract_strided_slice %101 {offsets = [0, 64], sizes = [1, 32], strides = [1, 1]} : vector<1x128xf32> to vector<1x32xf32>
    %116 = math.tanh %115 : vector<1x32xf32>
    %117 = arith.mulf %109, %116 : vector<1x32xf32>
    %118 = math.tanh %117 : vector<1x32xf32>
    %119 = arith.mulf %114, %118 : vector<1x32xf32>
    %120 = vector.broadcast %119 : vector<1x32xf32> to vector<4x32xf32>
    %121 = arith.mulf %96, %120 : vector<4x32xf32>
    %cst_46 = arith.constant dense<0.000000e+00> : vector<4xf32>
    %122 = vector.multi_reduction <add>, %121, %cst_46 [1] : vector<4x32xf32> to vector<4xf32>
    %123 = vector.shape_cast %122 : vector<4xf32> to vector<4x1xf32>
    %cst_47 = arith.constant 0.000000e+00 : f32
    %124 = vector.broadcast %cst_47 : f32 to vector<4x1xf32>
    %125 = arith.maximumf %123, %124 : vector<4x1xf32>
    %c48_48 = arith.constant 48 : index
    %c0_49 = arith.constant 0 : index
    %126 = vector.load %arg3[%c48_48, %c0_49] : memref<72x128xf32, #tpu.memory_space<vmem>>, vector<16x4xf32>
    %127 = vector.extract_strided_slice %126 {offsets = [0, 3], sizes = [16, 1], strides = [1, 1]} : vector<16x4xf32> to vector<16x1xf32>
    %128 = vector.extract_strided_slice %126 {offsets = [0, 0], sizes = [16, 1], strides = [1, 1]} : vector<16x4xf32> to vector<16x1xf32>
    %129 = vector.extract_strided_slice %1 {offsets = [0, 0], sizes = [1, 14], strides = [1, 1]} : vector<1x16xf32> to vector<1x14xf32>
    %130 = vector.broadcast %128 : vector<16x1xf32> to vector<16x14xf32>
    %131 = vector.broadcast %129 : vector<1x14xf32> to vector<16x14xf32>
    %132 = arith.mulf %130, %131 : vector<16x14xf32>
    %133 = vector.broadcast %127 : vector<16x1xf32> to vector<16x14xf32>
    %134 = arith.addf %133, %132 : vector<16x14xf32>
    %135 = vector.extract_strided_slice %126 {offsets = [0, 1], sizes = [16, 1], strides = [1, 1]} : vector<16x4xf32> to vector<16x1xf32>
    %136 = vector.extract_strided_slice %1 {offsets = [0, 1], sizes = [1, 14], strides = [1, 1]} : vector<1x16xf32> to vector<1x14xf32>
    %137 = vector.broadcast %135 : vector<16x1xf32> to vector<16x14xf32>
    %138 = vector.broadcast %136 : vector<1x14xf32> to vector<16x14xf32>
    %139 = arith.mulf %137, %138 : vector<16x14xf32>
    %140 = arith.addf %134, %139 : vector<16x14xf32>
    %141 = vector.extract_strided_slice %126 {offsets = [0, 2], sizes = [16, 1], strides = [1, 1]} : vector<16x4xf32> to vector<16x1xf32>
    %142 = vector.extract_strided_slice %1 {offsets = [0, 2], sizes = [1, 14], strides = [1, 1]} : vector<1x16xf32> to vector<1x14xf32>
    %143 = vector.broadcast %141 : vector<16x1xf32> to vector<16x14xf32>
    %144 = vector.broadcast %142 : vector<1x14xf32> to vector<16x14xf32>
    %145 = arith.mulf %143, %144 : vector<16x14xf32>
    %146 = arith.addf %140, %145 : vector<16x14xf32>
    %cst_50 = arith.constant 0.000000e+00 : f32
    %147 = vector.broadcast %cst_50 : f32 to vector<16x14xf32>
    %148 = arith.maximumf %146, %147 : vector<16x14xf32>
    %149 = vector.extract_strided_slice %148 {offsets = [0, 0], sizes = [16, 13], strides = [1, 1]} : vector<16x14xf32> to vector<16x13xf32>
    %150 = vector.extract_strided_slice %148 {offsets = [0, 1], sizes = [16, 13], strides = [1, 1]} : vector<16x14xf32> to vector<16x13xf32>
    %151 = arith.maximumf %149, %150 : vector<16x13xf32>
    %c48_51 = arith.constant 48 : index
    %c8 = arith.constant 8 : index
    %152 = vector.load %arg3[%c48_51, %c8] : memref<72x128xf32, #tpu.memory_space<vmem>>, vector<16x3xf32>
    %c64_52 = arith.constant 64 : index
    %c80_53 = arith.constant 80 : index
    %153 = vector.load %arg3[%c64_52, %c80_53] : memref<72x128xf32, #tpu.memory_space<vmem>>, vector<1x1xf32>
    %154 = vector.extract_strided_slice %152 {offsets = [0, 0], sizes = [16, 1], strides = [1, 1]} : vector<16x3xf32> to vector<16x1xf32>
    %155 = vector.extract_strided_slice %151 {offsets = [0, 0], sizes = [16, 7], strides = [1, 1]} : vector<16x13xf32> to vector<16x7xf32>
    %156 = vector.broadcast %154 : vector<16x1xf32> to vector<16x7xf32>
    %157 = arith.mulf %156, %155 : vector<16x7xf32>
    %cst_54 = arith.constant dense<0.000000e+00> : vector<7xf32>
    %158 = vector.multi_reduction <add>, %157, %cst_54 [0] : vector<16x7xf32> to vector<7xf32>
    %159 = vector.shape_cast %158 : vector<7xf32> to vector<1x7xf32>
    %160 = vector.broadcast %153 : vector<1x1xf32> to vector<1x7xf32>
    %161 = arith.addf %160, %159 : vector<1x7xf32>
    %162 = vector.extract_strided_slice %152 {offsets = [0, 1], sizes = [16, 1], strides = [1, 1]} : vector<16x3xf32> to vector<16x1xf32>
    %163 = vector.extract_strided_slice %151 {offsets = [0, 2], sizes = [16, 7], strides = [1, 1]} : vector<16x13xf32> to vector<16x7xf32>
    %164 = vector.broadcast %162 : vector<16x1xf32> to vector<16x7xf32>
    %165 = arith.mulf %164, %163 : vector<16x7xf32>
    %cst_55 = arith.constant dense<0.000000e+00> : vector<7xf32>
    %166 = vector.multi_reduction <add>, %165, %cst_55 [0] : vector<16x7xf32> to vector<7xf32>
    %167 = vector.shape_cast %166 : vector<7xf32> to vector<1x7xf32>
    %168 = arith.addf %161, %167 : vector<1x7xf32>
    %169 = vector.extract_strided_slice %152 {offsets = [0, 2], sizes = [16, 1], strides = [1, 1]} : vector<16x3xf32> to vector<16x1xf32>
    %170 = vector.extract_strided_slice %151 {offsets = [0, 4], sizes = [16, 7], strides = [1, 1]} : vector<16x13xf32> to vector<16x7xf32>
    %171 = vector.broadcast %169 : vector<16x1xf32> to vector<16x7xf32>
    %172 = arith.mulf %171, %170 : vector<16x7xf32>
    %cst_56 = arith.constant dense<0.000000e+00> : vector<7xf32>
    %173 = vector.multi_reduction <add>, %172, %cst_56 [0] : vector<16x7xf32> to vector<7xf32>
    %174 = vector.shape_cast %173 : vector<7xf32> to vector<1x7xf32>
    %175 = arith.addf %168, %174 : vector<1x7xf32>
    %cst_57 = arith.constant 0.000000e+00 : f32
    %176 = vector.broadcast %cst_57 : f32 to vector<1x7xf32>
    %177 = arith.maximumf %175, %176 : vector<1x7xf32>
    %178 = vector.extract_strided_slice %177 {offsets = [0, 0], sizes = [1, 1], strides = [1, 1]} : vector<1x7xf32> to vector<1x1xf32>
    %179 = vector.extract_strided_slice %177 {offsets = [0, 2], sizes = [1, 1], strides = [1, 1]} : vector<1x7xf32> to vector<1x1xf32>
    %180 = arith.maximumf %178, %179 : vector<1x1xf32>
    %181 = vector.extract_strided_slice %177 {offsets = [0, 4], sizes = [1, 1], strides = [1, 1]} : vector<1x7xf32> to vector<1x1xf32>
    %182 = vector.extract_strided_slice %177 {offsets = [0, 6], sizes = [1, 1], strides = [1, 1]} : vector<1x7xf32> to vector<1x1xf32>
    %183 = arith.maximumf %181, %182 : vector<1x1xf32>
    %184 = arith.addf %180, %183 : vector<1x1xf32>
    %cst_58 = arith.constant 5.000000e-01 : f32
    %185 = vector.broadcast %cst_58 : f32 to vector<1x1xf32>
    %186 = arith.mulf %184, %185 : vector<1x1xf32>
    %c48_59 = arith.constant 48 : index
    %c40_60 = arith.constant 40 : index
    %187 = vector.load %arg3[%c48_59, %c40_60] : memref<72x128xf32, #tpu.memory_space<vmem>>, vector<8x4xf32>
    %188 = vector.extract_strided_slice %187 {offsets = [0, 3], sizes = [8, 1], strides = [1, 1]} : vector<8x4xf32> to vector<8x1xf32>
    %189 = vector.extract_strided_slice %187 {offsets = [0, 0], sizes = [8, 1], strides = [1, 1]} : vector<8x4xf32> to vector<8x1xf32>
    %190 = vector.extract_strided_slice %125 {offsets = [0, 0], sizes = [1, 1], strides = [1, 1]} : vector<4x1xf32> to vector<1x1xf32>
    %191 = vector.broadcast %190 : vector<1x1xf32> to vector<8x1xf32>
    %192 = arith.mulf %189, %191 : vector<8x1xf32>
    %193 = arith.addf %188, %192 : vector<8x1xf32>
    %194 = vector.extract_strided_slice %187 {offsets = [0, 1], sizes = [8, 1], strides = [1, 1]} : vector<8x4xf32> to vector<8x1xf32>
    %195 = vector.extract_strided_slice %125 {offsets = [1, 0], sizes = [1, 1], strides = [1, 1]} : vector<4x1xf32> to vector<1x1xf32>
    %196 = vector.broadcast %195 : vector<1x1xf32> to vector<8x1xf32>
    %197 = arith.mulf %194, %196 : vector<8x1xf32>
    %198 = arith.addf %193, %197 : vector<8x1xf32>
    %199 = vector.extract_strided_slice %187 {offsets = [0, 2], sizes = [8, 1], strides = [1, 1]} : vector<8x4xf32> to vector<8x1xf32>
    %200 = vector.extract_strided_slice %125 {offsets = [2, 0], sizes = [1, 1], strides = [1, 1]} : vector<4x1xf32> to vector<1x1xf32>
    %201 = vector.broadcast %200 : vector<1x1xf32> to vector<8x1xf32>
    %202 = arith.mulf %199, %201 : vector<8x1xf32>
    %203 = arith.addf %198, %202 : vector<8x1xf32>
    %cst_61 = arith.constant 0.000000e+00 : f32
    %204 = vector.broadcast %cst_61 : f32 to vector<8x1xf32>
    %205 = arith.maximumf %203, %204 : vector<8x1xf32>
    %cst_62 = arith.constant dense<0.000000e+00> : vector<1xf32>
    %206 = vector.multi_reduction <add>, %205, %cst_62 [0] : vector<8x1xf32> to vector<1xf32>
    %207 = vector.shape_cast %206 : vector<1xf32> to vector<1x1xf32>
    %208 = vector.extract_strided_slice %187 {offsets = [0, 3], sizes = [8, 1], strides = [1, 1]} : vector<8x4xf32> to vector<8x1xf32>
    %209 = vector.extract_strided_slice %187 {offsets = [0, 0], sizes = [8, 1], strides = [1, 1]} : vector<8x4xf32> to vector<8x1xf32>
    %210 = vector.extract_strided_slice %125 {offsets = [1, 0], sizes = [1, 1], strides = [1, 1]} : vector<4x1xf32> to vector<1x1xf32>
    %211 = vector.broadcast %210 : vector<1x1xf32> to vector<8x1xf32>
    %212 = arith.mulf %209, %211 : vector<8x1xf32>
    %213 = arith.addf %208, %212 : vector<8x1xf32>
    %214 = vector.extract_strided_slice %187 {offsets = [0, 1], sizes = [8, 1], strides = [1, 1]} : vector<8x4xf32> to vector<8x1xf32>
    %215 = vector.extract_strided_slice %125 {offsets = [2, 0], sizes = [1, 1], strides = [1, 1]} : vector<4x1xf32> to vector<1x1xf32>
    %216 = vector.broadcast %215 : vector<1x1xf32> to vector<8x1xf32>
    %217 = arith.mulf %214, %216 : vector<8x1xf32>
    %218 = arith.addf %213, %217 : vector<8x1xf32>
    %219 = vector.extract_strided_slice %187 {offsets = [0, 2], sizes = [8, 1], strides = [1, 1]} : vector<8x4xf32> to vector<8x1xf32>
    %220 = vector.extract_strided_slice %125 {offsets = [3, 0], sizes = [1, 1], strides = [1, 1]} : vector<4x1xf32> to vector<1x1xf32>
    %221 = vector.broadcast %220 : vector<1x1xf32> to vector<8x1xf32>
    %222 = arith.mulf %219, %221 : vector<8x1xf32>
    %223 = arith.addf %218, %222 : vector<8x1xf32>
    %cst_63 = arith.constant 0.000000e+00 : f32
    %224 = vector.broadcast %cst_63 : f32 to vector<8x1xf32>
    %225 = arith.maximumf %223, %224 : vector<8x1xf32>
    %cst_64 = arith.constant dense<0.000000e+00> : vector<1xf32>
    %226 = vector.multi_reduction <add>, %225, %cst_64 [0] : vector<8x1xf32> to vector<1xf32>
    %227 = vector.shape_cast %226 : vector<1xf32> to vector<1x1xf32>
    %228 = arith.addf %207, %227 : vector<1x1xf32>
    %cst_65 = arith.constant 6.250000e-02 : f32
    %229 = vector.broadcast %cst_65 : f32 to vector<1x1xf32>
    %230 = arith.mulf %228, %229 : vector<1x1xf32>
    %c48_66 = arith.constant 48 : index
    %c32_67 = arith.constant 32 : index
    %231 = vector.load %arg3[%c48_66, %c32_67] : memref<72x128xf32, #tpu.memory_space<vmem>>, vector<10x4xf32>
    %232 = vector.extract_strided_slice %231 {offsets = [0, 3], sizes = [10, 1], strides = [1, 1]} : vector<10x4xf32> to vector<10x1xf32>
    %233 = vector.extract_strided_slice %231 {offsets = [0, 0], sizes = [10, 1], strides = [1, 1]} : vector<10x4xf32> to vector<10x1xf32>
    %234 = vector.broadcast %230 : vector<1x1xf32> to vector<10x1xf32>
    %235 = arith.mulf %233, %234 : vector<10x1xf32>
    %236 = arith.addf %232, %235 : vector<10x1xf32>
    %237 = vector.extract_strided_slice %231 {offsets = [0, 1], sizes = [10, 1], strides = [1, 1]} : vector<10x4xf32> to vector<10x1xf32>
    %238 = vector.broadcast %186 : vector<1x1xf32> to vector<10x1xf32>
    %239 = arith.mulf %237, %238 : vector<10x1xf32>
    %240 = arith.addf %236, %239 : vector<10x1xf32>
    %241 = vector.extract_strided_slice %231 {offsets = [0, 2], sizes = [10, 1], strides = [1, 1]} : vector<10x4xf32> to vector<10x1xf32>
    %242 = vector.broadcast %63 : vector<1x1xf32> to vector<10x1xf32>
    %243 = arith.mulf %241, %242 : vector<10x1xf32>
    %244 = arith.addf %240, %243 : vector<10x1xf32>
    %c48_68 = arith.constant 48 : index
    %c16_69 = arith.constant 16 : index
    %245 = vector.load %arg3[%c48_68, %c16_69] : memref<72x128xf32, #tpu.memory_space<vmem>>, vector<10x10xf32>
    %c48_70 = arith.constant 48 : index
    %c112 = arith.constant 112 : index
    %246 = vector.load %arg3[%c48_70, %c112] : memref<72x128xf32, #tpu.memory_space<vmem>>, vector<1x10xf32>
    %247 = vector.broadcast %244 : vector<10x1xf32> to vector<10x10xf32>
    %248 = arith.mulf %245, %247 : vector<10x10xf32>
    %cst_71 = arith.constant dense<0.000000e+00> : vector<10xf32>
    %249 = vector.multi_reduction <add>, %248, %cst_71 [0] : vector<10x10xf32> to vector<10xf32>
    %250 = vector.shape_cast %249 : vector<10xf32> to vector<1x10xf32>
    %251 = arith.addf %250, %246 : vector<1x10xf32>
    %c64_72 = arith.constant 64 : index
    %c64_73 = arith.constant 64 : index
    %252 = vector.load %arg3[%c64_72, %c64_73] : memref<72x128xf32, #tpu.memory_space<vmem>>, vector<1x10xf32>
    %c64_74 = arith.constant 64 : index
    %c88 = arith.constant 88 : index
    %253 = vector.load %arg3[%c64_74, %c88] : memref<72x128xf32, #tpu.memory_space<vmem>>, vector<1x1xf32>
    %254 = arith.mulf %252, %251 : vector<1x10xf32>
    %cst_75 = arith.constant dense<0.000000e+00> : vector<1xf32>
    %255 = vector.multi_reduction <add>, %254, %cst_75 [1] : vector<1x10xf32> to vector<1xf32>
    %256 = vector.shape_cast %255 : vector<1xf32> to vector<1x1xf32>
    %257 = arith.addf %256, %253 : vector<1x1xf32>
    %c0_76 = arith.constant 0 : index
    %c0_77 = arith.constant 0 : index
    %c0_78 = arith.constant 0 : index
    %258 = vector.load %arg4[%c0_76, %c0_77, %c0_78] : memref<1x1x1xf32, #tpu.memory_space<vmem>>, vector<1x1x1xf32>
    %259 = vector.shape_cast %258 : vector<1x1x1xf32> to vector<1x1xf32>
    %260 = vector.shape_cast %257 : vector<1x1xf32> to vector<1x1x1xf32>
    tpu.vector_store %arg4[%c0_76, %c0_77, %c0_78], %260 {strides = array<i32>} : memref<1x1x1xf32, #tpu.memory_space<vmem>>, vector<1x1x1xf32>,
    return
  }
  func.func @transform_0(%arg0: i32) -> (i32, i32, i32) {
    %c0_i32 = arith.constant 0 : i32
    %c0_i32_0 = arith.constant 0 : i32
    %c0_i32_1 = arith.constant 0 : i32
    return %arg0, %c0_i32, %c0_i32_0 : i32, i32, i32
  }
  func.func @transform_1(%arg0: i32) -> (i32, i32, i32) {
    %c0_i32 = arith.constant 0 : i32
    %c0_i32_0 = arith.constant 0 : i32
    %c0_i32_1 = arith.constant 0 : i32
    return %arg0, %c0_i32, %c0_i32_0 : i32, i32, i32
  }
  func.func @transform_2(%arg0: i32) -> (i32, i32) {
    %c0_i32 = arith.constant 0 : i32
    %c0_i32_0 = arith.constant 0 : i32
    %c0_i32_1 = arith.constant 0 : i32
    return %c0_i32, %c0_i32_0 : i32, i32
  }
  func.func @transform_3(%arg0: i32) -> (i32, i32, i32) {
    %c0_i32 = arith.constant 0 : i32
    %c0_i32_0 = arith.constant 0 : i32
    %c0_i32_1 = arith.constant 0 : i32
    return %arg0, %c0_i32, %c0_i32_0 : i32, i32, i32
  }
}

</mosaic_0001>

<llo_original>
// kernel: forward_batched.1
$region0: #{forward_batched.1}
  #allocation0 [shape = 'u32[]', space=smem, size = 0x4, offset = 0x4, fixed_abs, tag = 'smem constant byte address 0x4 - core index']
  #allocation1 [shape = 'u32[144,128]{1,0:T(1,128)}', space=vmem, size = 0x12000, scoped, tag = 'internal scratch']
  %s0 = inlined_call_operand.vmem [shape: f32[8,1,16], index: 0, kind: input, shape index: {}]
  %s1 = inlined_call_operand.vmem [shape: f32[8,16,1], index: 1, kind: input, shape index: {}]
  %s2 = inlined_call_operand.vmem [shape: f32[72,128], index: 2, kind: input, shape index: {}]
  %s3 = inlined_call_operand.vmem [shape: f32[8,1,1], index: 3, kind: output, shape index: {}]
  %s4 = sld [smem:[#allocation0]]
  $region45: #{forward_batched.1} parent=0
    _
  %s6 = ssub.s32 1, %s4
  %s7 = scalar_select 0, %s6, %s4
  loop: start=0, step=1, limit=10
  $region2: #{forward_batched.1} parent=0 // loop_pre_header
    _
  $region3: #{forward_batched.1} parent=0 // loop_header
    %s9 = sphi 0, %s13
    %p10 = scmp.ge.s32.totalorder %s9, 10
    %s19 = sphi 0, %s21
    %s22 = sphi 0, %s19
    %s23 = sphi 0, %s22
    %s39 = sphi 0, %s23
    %s45 = sphi 0, %s47
    %s48 = sphi 0, %s45
    %s49 = sphi 0, %s48
    %s65 = sphi 0, %s49
    %s69 = sphi 0, %s69
    %s71 = sphi 0, %s69
    %s72 = sphi 0, %s71
    %s86 = sphi 0, %s72
    %s92 = sphi 0, %s94
    %s95 = sphi 0, %s92
    %s96 = sphi 0, %s95
    %s112 = sphi 0, %s96
  $region4: #{forward_batched.1} parent=0 // loop_header_branch
    %12 = sbr.rel (%p10) target = $region8
  $region5: #{forward_batched.1} parent=0 // loop_body
    %s14 = ssub.s32 %s9, 1
    %s15 = ssub.s32 %s9, 2
    %s16 = sadd.s32 %s9, 1
    %s17 = ssub.s32 %s9, %s16
    %p18 = scmp.eq.s32.totalorder %s17, 0
    %s20 = sadd.s32 %s19, 1
    %s21 = scalar_select %p18, %s19, %s20
    %p24 = pneg %p18
    %p25 = scmp.eq.s32.totalorder %s9, 7
    %p26 = por %p24, %p25
    %p27 = scmp.ne.s32.totalorder %s19, %s22
    %p28 = scmp.eq.s32.totalorder %s9, 0
    %p29 = por %p27, %p28
    %p30 = scmp.ne.s32.totalorder %s19, %s22
    %p31 = scmp.eq.s32.totalorder %s14, 7
    %p32 = por %p30, %p31
    %p33 = scmp.ne.s32.totalorder %s22, %s23
    %p34 = scmp.eq.s32.totalorder %s14, 0
    %p35 = por %p33, %p34
    %p36 = scmp.ne.s32.totalorder %s22, %s23
    %p37 = scmp.eq.s32.totalorder %s15, 7
    %p38 = por %p36, %p37
    %p40 = scmp.ne.s32.totalorder %s23, %s39
    %p41 = scmp.eq.s32.totalorder %s15, 0
    %p42 = por %p40, %p41
    %s43 = ssub.s32 %s9, %s16
    %p44 = scmp.eq.s32.totalorder %s43, 0
    %s46 = sadd.s32 %s45, 1
    %s47 = scalar_select %p44, %s45, %s46
    %p50 = pneg %p44
    %p51 = scmp.eq.s32.totalorder %s9, 7
    %p52 = por %p50, %p51
    %p53 = scmp.ne.s32.totalorder %s45, %s48
    %p54 = scmp.eq.s32.totalorder %s9, 0
    %p55 = por %p53, %p54
    %p56 = scmp.ne.s32.totalorder %s45, %s48
    %p57 = scmp.eq.s32.totalorder %s14, 7
    %p58 = por %p56, %p57
    %p59 = scmp.ne.s32.totalorder %s48, %s49
    %p60 = scmp.eq.s32.totalorder %s14, 0
    %p61 = por %p59, %p60
    %p62 = scmp.ne.s32.totalorder %s48, %s49
    %p63 = scmp.eq.s32.totalorder %s15, 7
    %p64 = por %p62, %p63
    %p66 = scmp.ne.s32.totalorder %s49, %s65
    %p67 = scmp.eq.s32.totalorder %s15, 0
    %p68 = por %p66, %p67
    %s70 = sadd.s32 %s69, 1
    %p73 = scmp.eq.s32.totalorder %s9, 7
    %p74 = scmp.ne.s32.totalorder %s69, %s71
    %p75 = scmp.eq.s32.totalorder %s9, 0
    %p76 = por %p74, %p75
    %p77 = scmp.ne.s32.totalorder %s69, %s71
    %p78 = scmp.eq.s32.totalorder %s14, 7
    %p79 = por %p77, %p78
    %p80 = scmp.ne.s32.totalorder %s71, %s72
    %p81 = scmp.eq.s32.totalorder %s14, 0
    %p82 = por %p80, %p81
    %p83 = scmp.ne.s32.totalorder %s71, %s72
    %p84 = scmp.eq.s32.totalorder %s15, 7
    %p85 = por %p83, %p84
    %p87 = scmp.ne.s32.totalorder %s72, %s86
    %p88 = scmp.eq.s32.totalorder %s15, 0
    %p89 = por %p87, %p88
    %s90 = ssub.s32 %s9, %s16
    %p91 = scmp.eq.s32.totalorder %s90, 0
    %s93 = sadd.s32 %s92, 1
    %s94 = scalar_select %p91, %s92, %s93
    %p97 = pneg %p91
    %p98 = scmp.eq.s32.totalorder %s9, 7
    %p99 = por %p97, %p98
    %p100 = scmp.ne.s32.totalorder %s92, %s95
    %p101 = scmp.eq.s32.totalorder %s9, 0
    %p102 = por %p100, %p101
    %p103 = scmp.ne.s32.totalorder %s92, %s95
    %p104 = scmp.eq.s32.totalorder %s14, 7
    %p105 = por %p103, %p104
    %p106 = scmp.ne.s32.totalorder %s95, %s96
    %p107 = scmp.eq.s32.totalorder %s14, 0
    %p108 = por %p106, %p107
    %p109 = scmp.ne.s32.totalorder %s95, %s96
    %p110 = scmp.eq.s32.totalorder %s15, 7
    %p111 = por %p109, %p110
    %p113 = scmp.ne.s32.totalorder %s96, %s112
    %p114 = scmp.eq.s32.totalorder %s15, 0
    %p115 = por %p113, %p114
    %p116 = scmp.le.s32.totalorder 1, %s9
    %p117 = scmp.lt.s32.totalorder %s9, 9
    %p118 = pnand %p116, %p117
    %p119 = pneg %p118
    // Predicated region
    $region9: #{forward_batched.1} parent=5 // pred_check
      _
    $region10: #{forward_batched.1} parent=5 // pred_check_branch
      %121 = sbr.rel (%p118) target = $region12
    $region11: #{forward_batched.1} parent=5 // pred_region
      %s122 = ssub.s32 %s9, 1
      // Predicated region
      $region13: #{forward_batched.1} parent=11 // pred_check
        %p123 = pneg %p82
      $region14: #{forward_batched.1} parent=11 // pred_check_branch
        %125 = sbr.rel (%p123) target = $region16
      $region15: #{forward_batched.1} parent=11 // pred_region
        _
      $region16: #{forward_batched.1} parent=11 // pred_fallthru
        _
    $region12: #{forward_batched.1} parent=5 // pred_fallthru
      _
    %p126 = scmp.lt.s32.totalorder %s9, 8
    // Predicated region
    $region17: #{forward_batched.1} parent=5 // pred_check
      %p127 = pneg %p126
    $region18: #{forward_batched.1} parent=5 // pred_check_branch
      %129 = sbr.rel (%p127) target = $region20
    $region19: #{forward_batched.1} parent=5 // pred_region
      // Predicated region
      $region21: #{forward_batched.1} parent=19 // pred_check
        %p130 = pneg %p29
      $region22: #{forward_batched.1} parent=19 // pred_check_branch
        %132 = sbr.rel (%p130) target = $region24
      $region23: #{forward_batched.1} parent=19 // pred_region
        %p133 = scmp.lt.s32.totalorder %s9, 7
        %s134 = scalar_select %p133, %s9, 7
        %s135 = scalar_lea.vmem %s0, %s134
      $region24: #{forward_batched.1} parent=19 // pred_fallthru
        _
      // Predicated region
      $region25: #{forward_batched.1} parent=19 // pred_check
        %p136 = pneg %p55
      $region26: #{forward_batched.1} parent=19 // pred_check_branch
        %138 = sbr.rel (%p136) target = $region28
      $region27: #{forward_batched.1} parent=19 // pred_region
        %p139 = scmp.lt.s32.totalorder %s9, 7
        %s140 = scalar_select %p139, %s9, 7
        %s141 = smul.addr %s140, 2
        %s142 = smul.addr %s141, 8
        %s143 = scalar_lea.vmem %s1, %s142
      $region28: #{forward_batched.1} parent=19 // pred_fallthru
        _
    $region20: #{forward_batched.1} parent=5 // pred_fallthru
      _
    %p144 = scmp.le.s32.totalorder 1, %s9
    %p145 = scmp.lt.s32.totalorder %s9, 9
    %p146 = pnand %p144, %p145
    %p147 = pneg %p146
    // Predicated region
    $region29: #{forward_batched.1} parent=5 // pred_check
      _
    $region30: #{forward_batched.1} parent=5 // pred_check_branch
      %149 = sbr.rel (%p146) target = $region32
    $region31: #{forward_batched.1} parent=5 // pred_region
      %s150 = ssub.s32 %s9, 1
      %p151 = scmp.lt.s32.totalorder %s14, 7
      %s152 = scalar_select %p151, %s14, 7
      %s153 = scalar_lea.vmem %s0, %s152
      %p154 = pneg %p35
      %p155 = pneg %p32
      %p156 = scmp.lt.s32.totalorder %s14, 7
      %s157 = scalar_select %p156, %s14, 7
      %s158 = smul.addr %s157, 2
      %s159 = smul.addr %s158, 8
      %s160 = scalar_lea.vmem %s1, %s159
      %p161 = pneg %p61
      %p162 = pneg %p58
      %p163 = pneg %p82
      %p164 = pneg %p79
      %p165 = pneg %p108
      %p166 = pneg %p105
      %p167 = scmp.lt.s32.totalorder %s14, 7
      %s168 = scalar_select %p167, %s14, 7
      %s169 = scalar_lea.vmem %s3, %s168
      %p170 = scmp.lt.s32.totalorder %s14, 7
      %s171 = scalar_select %p170, %s14, 7
      %s172 = scalar_lea.vmem %s0, %s171
      %p173 = scmp.lt.s32.totalorder %s14, 7
      %s174 = scalar_select %p173, %s14, 7
      %s175 = smul.addr %s174, 2
      %s176 = smul.addr %s175, 8
      %s177 = scalar_lea.vmem %s1, %s176
      %p178 = scmp.lt.s32.totalorder %s14, 7
      %s179 = scalar_select %p178, %s14, 7
      %s180 = scalar_lea.vmem %s3, %s179
      %v181 = vld [vmem:[%s172] sm:$0x1]
      %v182 = vld [vmem:[%s177] sm:$0xff]
      %v183 = vld [vmem:[%s177 + $0x8] sm:$0xff]
      %v184 = vld [vmem:[%s2] sm:$0xff]
      %v185 = vld [vmem:[%s2 + $0x8] sm:$0xff]
      %v186 = vld [vmem:[%s2 + $0x24] sm:$0x1]
      %v187 = vld [vmem:[%s2 + $0x40] sm:$0x1]
      %189 = vset.pattern.permute.xlu0 0
      %190 = vperm.xlu0 %189, %v182
      %v191 = vpop.permute.xlu0 %190
      %194 = vset.pattern.permute.xlu0 0
      %195 = vperm.xlu0 %194, %v183
      %v196 = vpop.permute.xlu0 %195
      %v198 = vmul.f32 %v184, %v191
      %v199 = vmul.f32 %v185, %v196
      %v200 = vadd.f32 %v198, %v199
      %v201 = vrot.slane %v200, 4
      %v202 = vadd.f32 %v200, %v201
      %v203 = vrot.slane %v202, 2
      %v204 = vadd.f32 %v202, %v203
      %v205 = vrot.slane %v204, 1
      %v206 = vadd.f32 %v204, %v205
      %v207 = vadd.f32 %v206, %v186
      %v208 = vmul.f32 %v207, 0.5
      %v209 = vtanh.pop %v208
      %v210 = vadd.f32 %v209, 1.0
      %v211 = vmul.f32 %v210, 0.5
      %v212 = vtanh.pop %v207
      %214 = vrot.lane.b32.xlu0 %v212, 64
      %v215 = vpop.permute.xlu0 %214
      %v217 = vmul.f32 %v211, %v215
      %v218 = vtanh.pop %v217
      %220 = vrot.lane.b32.xlu0 %v218, 96
      %v221 = vpop.permute.xlu0 %220
      %v223 = vmul.f32 %v211, %v221
      %225 = vrot.lane.b32.xlu0 %v223, 32
      %v226 = vpop.permute.xlu0 %225
      %v228 = vmul.f32 %v187, %v226
      %vm229 = vcmask 253952
      %v230 = vsel %vm229, %v228, 0.0
      %231 = vadd.xlane.f32.xlu0 %v230
      %v232 = vpop.xlane.xlu0 %231
      %v233 = vld [vmem:[%s2 + $0x25] sm:$0x1]
      %v234 = vld [vmem:[%s2 + $0x26] sm:$0x1]
      %v235 = vmul.f32 %v233, %v232
      %v236 = vadd.f32 %v235, 0.0
      %v237 = vadd.f32 %v236, %v234
      %v238 = vmul.f32 %v237, 0.5
      %v239 = vtanh.pop %v238
      %v240 = vadd.f32 %v239, 1.0
      %v241 = vmul.f32 %v240, 0.5
      %v242 = vtanh.pop %v237
      %244 = vrot.lane.b32.xlu0 %v242, 64
      %v245 = vpop.permute.xlu0 %244
      %v247 = vmul.f32 %v241, %v245
      %v248 = vtanh.pop %v247
      %250 = vrot.lane.b32.xlu0 %v248, 96
      %v251 = vpop.permute.xlu0 %250
      %v253 = vmul.f32 %v241, %v251
      %255 = vrot.lane.b32.xlu0 %v253, 64
      %v256 = vpop.permute.xlu0 %255
      %v258 = vmul.f32 %v187, %v256
      %260 = vrot.lane.b32.xlu0 %v258, 96
      %v261 = vpop.permute.xlu0 %260
      %v263 = vsel %vm229, %v261, 0.0
      %264 = vadd.xlane.f32.xlu0 %v263
      %v265 = vpop.xlane.xlu0 %264
      %v266 = vmax.f32 %v265, 0.0
      %v267 = vld [vmem:[%s2 + $0x10] sm:$0xff]
      %v268 = vld [vmem:[%s2 + $0x18] sm:$0xff]
      %v269 = vld [vmem:[%s2 + $0x27] sm:$0x1]
      %v270 = vld [vmem:[%s2 + $0x30] sm:$0xf]
      %v271 = vmul.f32 %v267, %v191
      %v272 = vmul.f32 %v268, %v196
      %v273 = vadd.f32 %v271, %v272
      %v274 = vrot.slane %v273, 4
      %v275 = vadd.f32 %v273, %v274
      %v276 = vrot.slane %v275, 2
      %v277 = vadd.f32 %v275, %v276
      %v278 = vrot.slane %v277, 1
      %v279 = vadd.f32 %v277, %v278
      %v280 = vadd.f32 %v279, %v269
      %v281 = vmul.f32 %v280, 0.5
      %v282 = vtanh.pop %v281
      %v283 = vadd.f32 %v282, 1.0
      %v284 = vmul.f32 %v283, 0.5
      %v285 = vtanh.pop %v280
      %287 = vrot.lane.b32.xlu0 %v285, 64
      %v288 = vpop.permute.xlu0 %287
      %v290 = vmul.f32 %v284, %v288
      %v291 = vtanh.pop %v290
      %293 = vrot.lane.b32.xlu0 %v291, 96
      %v294 = vpop.permute.xlu0 %293
      %v296 = vmul.f32 %v284, %v294
      %v297 = vlaneseq
      %v298 = vshrl.u32 %v297, 7
      %v299 = vsub.s32 0, %v298
      %v300 = vrot.slane %v296, %v299
      %302 = vrot.lane.b32.xlu0 %v300, 80
      %v303 = vpop.permute.xlu0 %302
      %v305 = vmul.f32 %v270, %v303
      %307 = vrot.lane.b32.xlu0 %v305, 80
      %v308 = vpop.permute.xlu0 %307
      %vm310 = vcmask 257024
      %v311 = vsel %vm310, %v308, 0.0
      %312 = vadd.xlane.f32.xlu0 %v311
      %v313 = vpop.xlane.xlu0 %312
      %v314 = vld [vmem:[%s2 + $0x20] sm:$0xf]
      %v315 = vld [vmem:[%s2 + $0x28] sm:$0x1]
      %v316 = vmul.f32 %v314, %v313
      %vm317 = vcmask 1043456
      %v318 = vsel %vm317, %v316, 0.0
      %v319 = vrot.slane %v318, 4
      %v320 = vadd.f32 %v318, %v319
      %v321 = vrot.slane %v320, 2
      %v322 = vadd.f32 %v320, %v321
      %v323 = vrot.slane %v322, 1
      %v324 = vadd.f32 %v322, %v323
      %v325 = vadd.f32 %v324, %v315
      %v326 = vmul.f32 %v325, 0.5
      %v327 = vtanh.pop %v326
      %v328 = vadd.f32 %v327, 1.0
      %v329 = vmul.f32 %v328, 0.5
      %v330 = vtanh.pop %v325
      %332 = vrot.lane.b32.xlu0 %v330, 64
      %v333 = vpop.permute.xlu0 %332
      %v335 = vmul.f32 %v329, %v333
      %v336 = vtanh.pop %v335
      %338 = vrot.lane.b32.xlu0 %v336, 96
      %v339 = vpop.permute.xlu0 %338
      %v341 = vmul.f32 %v329, %v339
      %v342 = vlaneseq
      %v343 = vshrl.u32 %v342, 7
      %v344 = vsub.s32 0, %v343
      %v345 = vrot.slane %v341, %v344
      %347 = vrot.lane.b32.xlu0 %v345, 112
      %v348 = vpop.permute.xlu0 %347
      %v350 = vmul.f32 %v270, %v348
      %352 = vrot.lane.b32.xlu0 %v350, 48
      %v353 = vpop.permute.xlu0 %352
      %v355 = vsel %vm310, %v353, 0.0
      %356 = vadd.xlane.f32.xlu0 %v355
      %v357 = vpop.xlane.xlu0 %356
      %v358 = vmax.f32 %v357, 0.0
      %v359 = vld [vmem:[%s2 + $0x30] sm:$0xff]
      %v360 = vld [vmem:[%s2 + $0x38] sm:$0xff]
      %362 = vset.pattern.permute.xlu0 0
      %363 = vperm.xlu0 %362, %v359
      %v364 = vpop.permute.xlu0 %363
      %367 = vset.pattern.permute.xlu0 0
      %368 = vperm.xlu0 %367, %v360
      %v369 = vpop.permute.xlu0 %368
      %v372 = vlaneseq
      %v373 = vshrl.u32 %v372, 7
      %v374 = vsub.s32 0, %v373
      %v375 = vrot.slane %v181, %v374
      %v377 = vmul.f32 %v364, %v375
      %v378 = vmul.f32 %v369, %v375
      %379 = vset.pattern.permute.xlu0 3
      %380 = vperm.xlu0 %379, %v359
      %v381 = vpop.permute.xlu0 %380
      %383 = vset.pattern.permute.xlu0 3
      %384 = vperm.xlu0 %383, %v360
      %v385 = vpop.permute.xlu0 %384
      %v387 = vadd.f32 %v381, %v377
      %v388 = vadd.f32 %v385, %v378
      %389 = vset.pattern.permute.xlu0 1
      %390 = vperm.xlu0 %389, %v359
      %v391 = vpop.permute.xlu0 %390
      %393 = vset.pattern.permute.xlu0 1
      %394 = vperm.xlu0 %393, %v360
      %v395 = vpop.permute.xlu0 %394
      %v397 = vmul.f32 %v391, %v375
      %v398 = vmul.f32 %v395, %v375
      %401 = vrot.lane.b32.xlu0 %v397, 127
      %v402 = vpop.permute.xlu0 %401
      %403 = vrot.lane.b32.xlu0 %v398, 127
      %v404 = vpop.permute.xlu0 %403
      %v407 = vadd.f32 %v387, %v402
      %v408 = vadd.f32 %v388, %v404
      %409 = vset.pattern.permute.xlu0 2
      %410 = vperm.xlu0 %409, %v359
      %v411 = vpop.permute.xlu0 %410
      %413 = vset.pattern.permute.xlu0 2
      %414 = vperm.xlu0 %413, %v360
      %v415 = vpop.permute.xlu0 %414
      %v417 = vmul.f32 %v411, %v375
      %v418 = vmul.f32 %v415, %v375
      %421 = vrot.lane.b32.xlu0 %v417, 126
      %v422 = vpop.permute.xlu0 %421
      %423 = vrot.lane.b32.xlu0 %v418, 126
      %v424 = vpop.permute.xlu0 %423
      %v427 = vadd.f32 %v407, %v422
      %v428 = vadd.f32 %v408, %v424
      %v429 = vmax.f32 %v427, 0.0
      %v430 = vmax.f32 %v428, 0.0
      %433 = vrot.lane.b32.xlu0 %v429, 127
      %v434 = vpop.permute.xlu0 %433
      %435 = vrot.lane.b32.xlu0 %v430, 127
      %v436 = vpop.permute.xlu0 %435
      %v439 = vmax.f32 %v429, %v434
      %v440 = vmax.f32 %v430, %v436
      %441 = vset.pattern.permute.xlu0 8
      %442 = vperm.xlu0 %441, %v359
      %v443 = vpop.permute.xlu0 %442
      %445 = vset.pattern.permute.xlu0 8
      %446 = vperm.xlu0 %445, %v360
      %v447 = vpop.permute.xlu0 %446
      %v449 = vmul.f32 %v443, %v439
      %v450 = vmul.f32 %v447, %v440
      %vm451 = vcmask 56320
      %v452 = vsel %vm451, %v449, 0.0
      %v453 = vsel %vm451, %v450, 0.0
      %v454 = vadd.f32 %v452, %v453
      %v455 = vrot.slane %v454, 4
      %v456 = vadd.f32 %v454, %v455
      %v457 = vrot.slane %v456, 2
      %v458 = vadd.f32 %v456, %v457
      %v459 = vrot.slane %v458, 1
      %v460 = vadd.f32 %v458, %v459
      %462 = vset.pattern.permute.xlu0 80
      %463 = vperm.xlu0 %462, %v187
      %v464 = vpop.permute.xlu0 %463
      %v466 = vadd.f32 %v464, %v460
      %467 = vset.pattern.permute.xlu0 9
      %468 = vperm.xlu0 %467, %v359
      %v469 = vpop.permute.xlu0 %468
      %471 = vset.pattern.permute.xlu0 9
      %472 = vperm.xlu0 %471, %v360
      %v473 = vpop.permute.xlu0 %472
      %v475 = vmul.f32 %v469, %v439
      %v476 = vmul.f32 %v473, %v440
      %vm477 = vcmask 72720
      %v478 = vsel %vm477, %v475, 0.0
      %v479 = vsel %vm477, %v476, 0.0
      %v480 = vadd.f32 %v478, %v479
      %v481 = vrot.slane %v480, 4
      %v482 = vadd.f32 %v480, %v481
      %v483 = vrot.slane %v482, 2
      %v484 = vadd.f32 %v482, %v483
      %v485 = vrot.slane %v484, 1
      %v486 = vadd.f32 %v484, %v485
      %488 = vrot.lane.b32.xlu0 %v486, 126
      %v489 = vpop.permute.xlu0 %488
      %v491 = vadd.f32 %v466, %v489
      %492 = vset.pattern.permute.xlu0 10
      %493 = vperm.xlu0 %492, %v359
      %v494 = vpop.permute.xlu0 %493
      %496 = vset.pattern.permute.xlu0 10
      %497 = vperm.xlu0 %496, %v360
      %v498 = vpop.permute.xlu0 %497
      %v500 = vmul.f32 %v494, %v439
      %v501 = vmul.f32 %v498, %v440
      %vm502 = vcmask 89120
      %v503 = vsel %vm502, %v500, 0.0
      %v504 = vsel %vm502, %v501, 0.0
      %v505 = vadd.f32 %v503, %v504
      %v506 = vrot.slane %v505, 4
      %v507 = vadd.f32 %v505, %v506
      %v508 = vrot.slane %v507, 2
      %v509 = vadd.f32 %v507, %v508
      %v510 = vrot.slane %v509, 1
      %v511 = vadd.f32 %v509, %v510
      %513 = vrot.lane.b32.xlu0 %v511, 124
      %v514 = vpop.permute.xlu0 %513
      %v516 = vadd.f32 %v491, %v514
      %v517 = vmax.f32 %v516, 0.0
      %519 = vrot.lane.b32.xlu0 %v517, 126
      %v520 = vpop.permute.xlu0 %519
      %v522 = vmax.f32 %v517, %v520
      %524 = vrot.lane.b32.xlu0 %v522, 124
      %v525 = vpop.permute.xlu0 %524
      %v527 = vadd.f32 %v522, %v525
      %v528 = vmul.f32 %v527, 0.5
      %v529 = vld [vmem:[%s2 + $0x30] sm:$0xff]
      %v530 = vlaneseq
      %v531 = vshrl.u32 %v530, 7
      %v532 = vsub.s32 0, %v531
      %v533 = vrot.slane %v358, %v532
      %v534 = vmul.f32 %v529, %v533
      %536 = vrot.lane.b32.xlu0 %v534, 3
      %v537 = vpop.permute.xlu0 %536
      %v539 = vadd.f32 %v529, %v537
      %v540 = vlaneseq
      %v541 = vshrl.u32 %v540, 7
      %v542 = vsub.s32 1, %v541
      %v543 = vrot.slane %v358, %v542
      %v544 = vmul.f32 %v529, %v543
      %546 = vrot.lane.b32.xlu0 %v544, 2
      %v547 = vpop.permute.xlu0 %546
      %v549 = vadd.f32 %v539, %v547
      %v550 = vlaneseq
      %v551 = vshrl.u32 %v550, 7
      %v552 = vsub.s32 2, %v551
      %v553 = vrot.slane %v358, %v552
      %v554 = vmul.f32 %v529, %v553
      %556 = vrot.lane.b32.xlu0 %v554, 1
      %v557 = vpop.permute.xlu0 %556
      %v559 = vadd.f32 %v549, %v557
      %v560 = vmax.f32 %v559, 0.0
      %vm561 = vcmask 359768
      %v562 = vsel %vm561, %v560, 0.0
      %v563 = vrot.slane %v562, 4
      %v564 = vadd.f32 %v562, %v563
      %v565 = vrot.slane %v564, 2
      %v566 = vadd.f32 %v564, %v565
      %v567 = vrot.slane %v566, 1
      %v568 = vadd.f32 %v566, %v567
      %569 = vrot.lane.b32.xlu0 %v544, 3
      %v570 = vpop.permute.xlu0 %569
      %v572 = vadd.f32 %v529, %v570
      %573 = vrot.lane.b32.xlu0 %v554, 2
      %v574 = vpop.permute.xlu0 %573
      %v576 = vadd.f32 %v572, %v574
      %v577 = vlaneseq
      %v578 = vshrl.u32 %v577, 7
      %v579 = vsub.s32 3, %v578
      %v580 = vrot.slane %v358, %v579
      %v581 = vmul.f32 %v529, %v580
      %583 = vrot.lane.b32.xlu0 %v581, 1
      %v584 = vpop.permute.xlu0 %583
      %v586 = vadd.f32 %v576, %v584
      %v587 = vmax.f32 %v586, 0.0
      %v588 = vsel %vm561, %v587, 0.0
      %v589 = vrot.slane %v588, 4
      %v590 = vadd.f32 %v588, %v589
      %v591 = vrot.slane %v590, 2
      %v592 = vadd.f32 %v590, %v591
      %v593 = vrot.slane %v592, 1
      %v594 = vadd.f32 %v592, %v593
      %v595 = vadd.f32 %v568, %v594
      %v596 = vmul.f32 %v595, 0.0625
      %v597 = vld [vmem:[%s2 + $0x38] sm:$0x3]
      %599 = vrot.lane.b32.xlu0 %v596, 117
      %v600 = vpop.permute.xlu0 %599
      %v602 = vmul.f32 %v529, %v600
      %v603 = vmul.f32 %v597, %v600
      %606 = vrot.lane.b32.xlu0 %v602, 3
      %v607 = vpop.permute.xlu0 %606
      %608 = vrot.lane.b32.xlu0 %v603, 3
      %v609 = vpop.permute.xlu0 %608
      %v612 = vadd.f32 %v529, %v607
      %v613 = vadd.f32 %v597, %v609
      %v614 = vlaneseq
      %v615 = vshrl.u32 %v614, 7
      %v616 = vsub.s32 0, %v615
      %v617 = vrot.slane %v528, %v616
      %619 = vrot.lane.b32.xlu0 %v617, 33
      %v620 = vpop.permute.xlu0 %619
      %v622 = vmul.f32 %v529, %v620
      %v623 = vmul.f32 %v597, %v620
      %626 = vrot.lane.b32.xlu0 %v622, 2
      %v627 = vpop.permute.xlu0 %626
      %628 = vrot.lane.b32.xlu0 %v623, 2
      %v629 = vpop.permute.xlu0 %628
      %v632 = vadd.f32 %v612, %v627
      %v633 = vadd.f32 %v613, %v629
      %v634 = vlaneseq
      %v635 = vshrl.u32 %v634, 7
      %v636 = vsub.s32 0, %v635
      %v637 = vrot.slane %v266, %v636
      %v638 = vmul.f32 %v529, %v637
      %v639 = vmul.f32 %v597, %v637
      %642 = vrot.lane.b32.xlu0 %v638, 1
      %v643 = vpop.permute.xlu0 %642
      %644 = vrot.lane.b32.xlu0 %v639, 1
      %v645 = vpop.permute.xlu0 %644
      %v648 = vadd.f32 %v632, %v643
      %v649 = vadd.f32 %v633, %v645
      %v650 = vld [vmem:[%s2 + $0x30] sm:$0x1]
      %652 = vset.pattern.permute.xlu0 35
      %653 = vperm.xlu0 %652, %v648
      %v654 = vpop.permute.xlu0 %653
      %657 = vset.pattern.permute.xlu0 35
      %658 = vperm.xlu0 %657, %v649
      %v659 = vpop.permute.xlu0 %658
      %v661 = vmul.f32 %v529, %v654
      %v662 = vmul.f32 %v597, %v659
      %vm663 = vcmask 212096
      %v664 = vsel %vm663, %v661, 0.0
      %vm665 = vcmask 205952
      %v666 = vsel %vm665, %v662, 0.0
      %v667 = vadd.f32 %v664, %v666
      %v668 = vrot.slane %v667, 4
      %v669 = vadd.f32 %v667, %v668
      %v670 = vrot.slane %v669, 2
      %v671 = vadd.f32 %v669, %v670
      %v672 = vrot.slane %v671, 1
      %v673 = vadd.f32 %v671, %v672
      %675 = vrot.lane.b32.xlu0 %v650, 32
      %v676 = vpop.permute.xlu0 %675
      %v678 = vadd.f32 %v673, %v676
      %680 = vrot.lane.b32.xlu0 %v678, 48
      %v681 = vpop.permute.xlu0 %680
      %v683 = vmul.f32 %v187, %v681
      %685 = vrot.lane.b32.xlu0 %v683, 64
      %v686 = vpop.permute.xlu0 %685
      %vm688 = vcmask 73728
      %v689 = vsel %vm688, %v686, 0.0
      %690 = vadd.xlane.f32.xlu0 %v689
      %v691 = vpop.xlane.xlu0 %690
      %v692 = vadd.f32 %v691, %v187
      %694 = vrot.lane.b32.xlu0 %v692, 40
      %v695 = vpop.permute.xlu0 %694
      %vm697 = vcmask 0
      %698 = vst.msk [vmem:[%s180] sm:$0x1] %vm697, %v695
      %p699 = scmp.lt.s32.totalorder %s14, 7
      %s700 = scalar_select %p699, %s14, 7
      %s701 = scalar_lea.vmem %s3, %s700
      // Predicated region
      $region33: #{forward_batched.1} parent=31 // pred_check
        %p702 = pneg %p105
      $region34: #{forward_batched.1} parent=31 // pred_check_branch
        %704 = sbr.rel (%p702) target = $region36
      $region35: #{forward_batched.1} parent=31 // pred_region
        _
      $region36: #{forward_batched.1} parent=31 // pred_fallthru
        _
    $region32: #{forward_batched.1} parent=5 // pred_fallthru
      _
    %p705 = scmp.le.s32.totalorder 2, %s9
    // Predicated region
    $region37: #{forward_batched.1} parent=5 // pred_check
      %p706 = pneg %p705
    $region38: #{forward_batched.1} parent=5 // pred_check_branch
      %708 = sbr.rel (%p706) target = $region40
    $region39: #{forward_batched.1} parent=5 // pred_region
      %s709 = ssub.s32 %s9, 2
      // Predicated region
      $region41: #{forward_batched.1} parent=39 // pred_check
        %p710 = pneg %p111
      $region42: #{forward_batched.1} parent=39 // pred_check_branch
        %712 = sbr.rel (%p710) target = $region44
      $region43: #{forward_batched.1} parent=39 // pred_region
        %p713 = scmp.lt.s32.totalorder %s15, 7
        %s714 = scalar_select %p713, %s15, 7
        %s715 = scalar_lea.vmem %s3, %s714
      $region44: #{forward_batched.1} parent=39 // pred_fallthru
        _
    $region40: #{forward_batched.1} parent=5 // pred_fallthru
      _
  $region6: #{forward_batched.1} parent=0 // loop_footer
    %s13 = sadd.s32 1, %s9
  $region7: #{forward_batched.1} parent=0 // loop_footer_branch
    %8 = sbr.rel target = $region3
  $region8: #{forward_batched.1} parent=0 // loop_exit
    _

</llo_original>
